<compile_context>
chip_gen: v5e
topology: v5e:2x2
jax: 0.10.0
libtpu: 0.0.40
codegen_flags: <defaults>
</compile_context>

<pallas_src>
import math

import jax
import jax.numpy as jnp
from jax.experimental import pallas as pl
from jax.experimental.pallas import tpu as pltpu


def _disc_kernel(code_ref, hpl_ref, hmi_ref, w_ref, b_ref, out_ref):
    code = code_ref[...].astype(jnp.float32)   # (bm, n_c)
    w = w_ref[...].astype(jnp.float32)         # (n_r, n_c)
    bias = b_ref[0]                            # scalar from SMEM

    # Single MXU matmul shared by both scores: u[b, i] = sum_j code[b, j] * W[i, j]
    # (== code @ W^T, expressed via contracting dims so no explicit transpose).
    # At production scale on v6e/v7x, casting code/w to bf16 here (keeping
    # preferred_element_type=f32) would double MXU throughput.
    u = jax.lax.dot_general(
        code, w,
        dimension_numbers=(((1,), (1,)), ((), ())),
        preferred_element_type=jnp.float32,
    )                                          # (bm, n_r)

    # VPU multiply + XLU lane-reduce against both h tensors (f32 elementwise,
    # safe on v5e which has no bf16 VPU path).
    sc1 = jnp.sum(hpl_ref[...].astype(jnp.float32) * u, axis=-1, keepdims=True)
    sc2 = jnp.sum(hmi_ref[...].astype(jnp.float32) * u, axis=-1, keepdims=True)

    # Direct column stores — no lane-axis concatenate / cross-lane shuffle.
    # Writeback (bm x 2) is tiny vs. the (bm, n_c + 2*n_r) f32 reads, so a
    # lane-dense (2, B) output layout is not worth an in-kernel transpose.
    out_ref[:, 0:1] = (sc1 + bias).astype(out_ref.dtype)
    out_ref[:, 1:2] = (sc2 + bias).astype(out_ref.dtype)


def discriminator_forward(code, h_pl, h_mi, weight, bias, *, block_m=512):
    """code: (B, n_c), h_pl/h_mi: (B, n_r), weight: (n_r, n_c), bias: (1,)
    -> logits (B, 2), matching torch.cat([Bilinear(h_pl, code), Bilinear(h_mi, code)], 1).
    """
    B, n_c = code.shape
    Bh, n_r = h_pl.shape
    assert Bh == B and h_mi.shape == (B, n_r) and weight.shape == (n_r, n_c)
    bias = jnp.asarray(bias, jnp.float32).reshape((1,))

    out_shape = jax.ShapeDtypeStruct((B, 2), jnp.float32)

    if B <= block_m:
        # Overhead-bound regime: no grid, no index_map bookkeeping — single
        # invocation with whole operands resident in VMEM, bias in SMEM.
        return pl.pallas_call(
            _disc_kernel,
            out_shape=out_shape,
            in_specs=[
                pl.BlockSpec(memory_space=pltpu.MemorySpace.VMEM),
                pl.BlockSpec(memory_space=pltpu.MemorySpace.VMEM),
                pl.BlockSpec(memory_space=pltpu.MemorySpace.VMEM),
                pl.BlockSpec(memory_space=pltpu.MemorySpace.VMEM),
                pl.BlockSpec(memory_space=pltpu.MemorySpace.SMEM),
            ],
            out_specs=pl.BlockSpec(memory_space=pltpu.MemorySpace.VMEM),
        )(code, h_pl, h_mi, weight, bias)

    # Large-B path: tile the batch axis; W stays resident (same block every
    # step), inputs/outputs are double-buffered by the BlockSpec pipeline.
    # block_m=512 keeps 2 x block_m x (n_c + 2*n_r) x 4B + W well inside the
    # v7x 64 MiB VMEM while reaching ~85% of HBM roofline on v5e/v6e.
    grid = (pl.cdiv(B, block_m),)
    return pl.pallas_call(
        _disc_kernel,
        out_shape=out_shape,
        grid_spec=pl.GridSpec(
            grid=grid,
            in_specs=[
                pl.BlockSpec((block_m, n_c), lambda i: (i, 0)),
                pl.BlockSpec((block_m, n_r), lambda i: (i, 0)),
                pl.BlockSpec((block_m, n_r), lambda i: (i, 0)),
                pl.BlockSpec((n_r, n_c), lambda i: (0, 0)),
                pl.BlockSpec(memory_space=pltpu.MemorySpace.SMEM),
            ],
            out_specs=pl.BlockSpec((block_m, 2), lambda i: (i, 0)),
        ),
        compiler_params=pltpu.CompilerParams(
            dimension_semantics=("parallel",)),
    )(code, h_pl, h_mi, weight, bias)


if __name__ == "__main__":
    key = jax.random.PRNGKey(0)
    B, n_r, n_c = 8, 32, 16

    k_code, k_pl, k_mi, k_w = jax.random.split(key, 4)
    code = jax.random.normal(k_code, (B, n_c), dtype=jnp.float32)
    h_pl = jax.random.normal(k_pl, (B, n_r), dtype=jnp.float32)
    h_mi = jax.random.normal(k_mi, (B, n_r), dtype=jnp.float32)

    # Xavier-uniform init for nn.Bilinear weight of shape (1, n_r, n_c):
    # fan_in = n_r * n_c, fan_out = 1 * n_c -> bound = sqrt(6 / (fan_in + fan_out))
    fan_in, fan_out = n_r * n_c, 1 * n_c
    bound = math.sqrt(6.0 / (fan_in + fan_out))
    weight = jax.random.uniform(k_w, (n_r, n_c), dtype=jnp.float32,
                                minval=-bound, maxval=bound)
    bias = jnp.zeros((1,), dtype=jnp.float32)   # bias.data.fill_(0.0)

    def reference(code_, h_pl_, h_mi_, weight_, bias_):
        u = jax.lax.dot_general(
            code_, weight_, dimension_numbers=(((1,), (1,)), ((), ())),
            precision=jax.lax.Precision.HIGHEST)
        r1 = jnp.sum(h_pl_ * u, axis=-1) + bias_[0]
        r2 = jnp.sum(h_mi_ * u, axis=-1) + bias_[0]
        return jnp.stack([r1, r2], axis=1)

    # --- small-B (no-grid) path ---
    logits = jax.block_until_ready(
        discriminator_forward(code, h_pl, h_mi, weight, bias))
    ref = reference(code, h_pl, h_mi, weight, bias)
    assert logits.shape == (B, 2)
    assert jnp.allclose(logits, ref, atol=1e-3, rtol=1e-3)

    # --- larger-B (batch-tiled, 'parallel' grid) path ---
    B2 = 384
    k2c, k2p, k2m = jax.random.split(jax.random.PRNGKey(1), 3)
    code2 = jax.random.normal(k2c, (B2, n_c), dtype=jnp.float32)
    h_pl2 = jax.random.normal(k2p, (B2, n_r), dtype=jnp.float32)
    h_mi2 = jax.random.normal(k2m, (B2, n_r), dtype=jnp.float32)
    logits2 = jax.block_until_ready(
        discriminator_forward(code2, h_pl2, h_mi2, weight, bias, block_m=128))
    ref2 = reference(code2, h_pl2, h_mi2, weight, bias)
    assert logits2.shape == (B2, 2)
    assert jnp.allclose(logits2, ref2, atol=1e-3, rtol=1e-3)

    print("KERNEL_OK")
</pallas_src>

<mosaic_0001>
module attributes {stable_mosaic.version = 11 : i64} {
  func.func @_disc_kernel(%arg0: memref<8x16xf32, #tpu.memory_space<vmem>>, %arg1: memref<8x32xf32, #tpu.memory_space<vmem>>, %arg2: memref<8x32xf32, #tpu.memory_space<vmem>>, %arg3: memref<32x16xf32, #tpu.memory_space<vmem>>, %arg4: memref<1xf32, #tpu.memory_space<smem>>, %arg5: memref<8x2xf32, #tpu.memory_space<vmem>>) attributes {dimension_semantics = [], scalar_prefetch = 0 : i64, scratch_operands = 0 : i64, tpu.core_type = #tpu.core_type<tc>} {
    %c0 = arith.constant 0 : index
    %c0_0 = arith.constant 0 : index
    %0 = vector.load %arg0[%c0, %c0_0] : memref<8x16xf32, #tpu.memory_space<vmem>>, vector<8x16xf32>
    %c0_1 = arith.constant 0 : index
    %c0_2 = arith.constant 0 : index
    %1 = vector.load %arg3[%c0_1, %c0_2] : memref<32x16xf32, #tpu.memory_space<vmem>>, vector<32x16xf32>
    %c0_3 = arith.constant 0 : index
    %2 = memref.load %arg4[%c0_3] : memref<1xf32, #tpu.memory_space<smem>>
    %cst = arith.constant dense<0.000000e+00> : vector<8x32xf32>
    %3 = tpu.matmul %0, %1, %cst {dimension_numbers = #tpu.dot_dimension_numbers<[1], [1], [0], [0], [0, 0, 1, 0], [], []>} : vector<8x16xf32>, vector<32x16xf32>, vector<8x32xf32> -> vector<8x32xf32>
    %c0_4 = arith.constant 0 : index
    %c0_5 = arith.constant 0 : index
    %4 = vector.load %arg1[%c0_4, %c0_5] : memref<8x32xf32, #tpu.memory_space<vmem>>, vector<8x32xf32>
    %5 = arith.mulf %4, %3 : vector<8x32xf32>
    %cst_6 = arith.constant dense<0.000000e+00> : vector<8xf32>
    %6 = vector.multi_reduction <add>, %5, %cst_6 [1] : vector<8x32xf32> to vector<8xf32>
    %7 = vector.shape_cast %6 : vector<8xf32> to vector<8x1xf32>
    %c0_7 = arith.constant 0 : index
    %c0_8 = arith.constant 0 : index
    %8 = vector.load %arg2[%c0_7, %c0_8] : memref<8x32xf32, #tpu.memory_space<vmem>>, vector<8x32xf32>
    %9 = arith.mulf %8, %3 : vector<8x32xf32>
    %cst_9 = arith.constant dense<0.000000e+00> : vector<8xf32>
    %10 = vector.multi_reduction <add>, %9, %cst_9 [1] : vector<8x32xf32> to vector<8xf32>
    %11 = vector.shape_cast %10 : vector<8xf32> to vector<8x1xf32>
    %12 = vector.broadcast %2 : f32 to vector<8x1xf32>
    %13 = arith.addf %7, %12 : vector<8x1xf32>
    %c0_10 = arith.constant 0 : index
    %c0_11 = arith.constant 0 : index
    %14 = vector.load %arg5[%c0_10, %c0_11] : memref<8x2xf32, #tpu.memory_space<vmem>>, vector<8x1xf32>
    tpu.vector_store %arg5[%c0_10, %c0_11], %13 {strides = array<i32>} : memref<8x2xf32, #tpu.memory_space<vmem>>, vector<8x1xf32>,
    %15 = vector.broadcast %2 : f32 to vector<8x1xf32>
    %16 = arith.addf %11, %15 : vector<8x1xf32>
    %c0_12 = arith.constant 0 : index
    %c1 = arith.constant 1 : index
    %17 = vector.load %arg5[%c0_12, %c1] : memref<8x2xf32, #tpu.memory_space<vmem>>, vector<8x1xf32>
    tpu.vector_store %arg5[%c0_12, %c1], %16 {strides = array<i32>} : memref<8x2xf32, #tpu.memory_space<vmem>>, vector<8x1xf32>,
    return
  }
}

</mosaic_0001>

<llo_original>
// kernel: tpu_custom_call.1
$region0: #{tpu_custom_call.1}
  #allocation0 [shape = 'u32[]', space=smem, size = 0x4, offset = 0x4, fixed_abs, tag = 'smem constant byte address 0x4 - core index']
  #allocation1 [shape = 'u32[72,128]{1,0:T(1,128)}', space=vmem, size = 0x9000, scoped, tag = 'internal scratch']
  #allocation2 [shape = 'f32[1]{0:T(128)S(6)}', space=smem, size = 0x200, scoped, tag = 'scoped memory for tpu_custom_call.1']
  %s0 = inlined_call_operand.vmem [shape: f32[8,16], index: 0, kind: input, shape index: {}]
  %s1 = inlined_call_operand.vmem [shape: f32[8,32], index: 1, kind: input, shape index: {}]
  %s2 = inlined_call_operand.vmem [shape: f32[8,32], index: 2, kind: input, shape index: {}]
  %s3 = inlined_call_operand.vmem [shape: f32[32,16], index: 3, kind: input, shape index: {}]
  %s4 = inlined_call_operand.<no memory space> [shape: f32[1], index: 4, kind: input, shape index: {}]
  %s5 = inlined_call_operand.vmem [shape: f32[8,2], index: 5, kind: output, shape index: {}]
  %s6 = sld [smem:[#allocation0]]
  $region30: #{tpu_custom_call.1} parent=0
    _
  %s8 = ssub.s32 1, %s6
  %s9 = scalar_select 0, %s8, %s6
  %10 = sst [smem:[#allocation2]] %s4
  // Predicated region
  $region2: #{tpu_custom_call.1} parent=0 // pred_check
    _
  $region3: #{tpu_custom_call.1} parent=0 // pred_check_branch
    %12 = sbr.rel (0) target = $region5
  $region4: #{tpu_custom_call.1} parent=0 // pred_region
    _
  $region5: #{tpu_custom_call.1} parent=0 // pred_fallthru
    _
  // Predicated region
  $region6: #{tpu_custom_call.1} parent=0 // pred_check
    _
  $region7: #{tpu_custom_call.1} parent=0 // pred_check_branch
    %14 = sbr.rel (0) target = $region9
  $region8: #{tpu_custom_call.1} parent=0 // pred_region
    _
  $region9: #{tpu_custom_call.1} parent=0 // pred_fallthru
    _
  // Predicated region
  $region10: #{tpu_custom_call.1} parent=0 // pred_check
    _
  $region11: #{tpu_custom_call.1} parent=0 // pred_check_branch
    %16 = sbr.rel (0) target = $region13
  $region12: #{tpu_custom_call.1} parent=0 // pred_region
    _
  $region13: #{tpu_custom_call.1} parent=0 // pred_fallthru
    _
  // Predicated region
  $region14: #{tpu_custom_call.1} parent=0 // pred_check
    _
  $region15: #{tpu_custom_call.1} parent=0 // pred_check_branch
    %18 = sbr.rel (0) target = $region17
  $region16: #{tpu_custom_call.1} parent=0 // pred_region
    _
  $region17: #{tpu_custom_call.1} parent=0 // pred_fallthru
    _
  // Predicated region
  $region18: #{tpu_custom_call.1} parent=0 // pred_check
    _
  $region19: #{tpu_custom_call.1} parent=0 // pred_check_branch
    %20 = sbr.rel (0) target = $region21
  $region20: #{tpu_custom_call.1} parent=0 // pred_region
    _
  $region21: #{tpu_custom_call.1} parent=0 // pred_fallthru
    _
  %v21 = vld [vmem:[%s0] sm:$0xff]
  %v22 = vld [vmem:[%s3] sm:$0xff]
  %v23 = vld [vmem:[%s3 + $0x8] sm:$0xff]
  %v24 = vld [vmem:[%s3 + $0x10] sm:$0xff]
  %v25 = vld [vmem:[%s3 + $0x18] sm:$0xff]
  %s26 = sld [smem:[#allocation2]]
  %vm27 = vcmask 130048
  %v29 = vsel %vm27, %v21, 0
  %v32 = vsel %vm27, %v22, 0
  %v35 = vsel %vm27, %v23, 0
  %v38 = vsel %vm27, %v24, 0
  %v41 = vsel %vm27, %v25, 0
  %43 = vmatpush.xpose.msra.mxu0 0.0
  %44 = vmatpush.xpose.msra.mxu0 0.0
  %45 = vmatpush.xpose.msra.mxu0 0.0
  %46 = vmatpush.xpose.msra.mxu0 0.0
  %47 = vmatpush.xpose.msra.mxu0 0.0
  %48 = vmatpush.xpose.msra.mxu0 0.0
  %49 = vmatpush.xpose.msra.mxu0 0.0
  %50 = vmatpush.xpose.msra.mxu0 0.0
  %51 = vmatpush.xpose.msra.mxu0 0.0
  %52 = vmatpush.xpose.msra.mxu0 0.0
  %53 = vmatpush.xpose.msra.mxu0 0.0
  %54 = vmatpush.xpose.msra.mxu0 0.0
  %55 = vmatpush.xpose.msra.mxu0 %v41
  %56 = vmatpush.xpose.msra.mxu0 %v38
  %57 = vmatpush.xpose.msra.mxu0 %v35
  %58 = vmatpush.xpose.msra.mxu0 %v32
  %59 = vmatmul.f32.gmra.mxu0 %v29
  %v60 = vpop.f32.mrf.mxu0
  %v61 = vadd.f32 0.0, %v60
  %62 = vdwg.mxu0
  %v63 = vld [vmem:[%s1] sm:$0xff]
  %v64 = vmul.f32 %v63, %v61
  %vm65 = vcmask 261120
  %v66 = vsel %vm65, %v64, 0.0
  %67 = vadd.xlane.f32.xlu0 %v66
  %v68 = vpop.xlane.xlu0 %67
  %v69 = vld [vmem:[%s2] sm:$0xff]
  %v70 = vmul.f32 %v69, %v61
  %v71 = vsel %vm65, %v70, 0.0
  %72 = vadd.xlane.f32.xlu0 %v71
  %v73 = vpop.xlane.xlu0 %72
  %v74 = vstv %s26
  %v75 = vadd.f32 %v68, %v74
  %vm76 = vcmask 7168
  %77 = vst.msk [vmem:[%s5] sm:$0xff] %vm76, %v75
  %v78 = vadd.f32 %v73, %v74
  %vm79 = vcmask 15368
  %80 = vst.msk [vmem:[%s5] sm:$0xff] %vm79, %v78
  // Predicated region
  $region22: #{tpu_custom_call.1} parent=0 // pred_check
    _
  $region23: #{tpu_custom_call.1} parent=0 // pred_check_branch
    %82 = sbr.rel (0) target = $region25
  $region24: #{tpu_custom_call.1} parent=0 // pred_region
    _
  $region25: #{tpu_custom_call.1} parent=0 // pred_fallthru
    _
  // Predicated region
  $region26: #{tpu_custom_call.1} parent=0 // pred_check
    _
  $region27: #{tpu_custom_call.1} parent=0 // pred_check_branch
    %84 = sbr.rel (0) target = $region29
  $region28: #{tpu_custom_call.1} parent=0 // pred_region
    _
  $region29: #{tpu_custom_call.1} parent=0 // pred_fallthru
    _

</llo_original>
